<compile_context>
chip_gen: v7x
topology: tpu7x:2x2x1
jax: 0.10.0
libtpu: 0.0.40
codegen_flags: <defaults>
</compile_context>

<pallas_src>
import numpy as np
import jax
import jax.numpy as jnp
from jax import lax
from jax.experimental import pallas as pl
from jax.experimental.pallas import tpu as pltpu


# ----------------------------- Pallas kernel --------------------------------

def _fused_cnn_kernel(x_ref, w1_ref, b1_ref, w2_ref, b2_ref,
                      w3_ref, b3_ref, w4_ref, b4_ref, o_ref):
    """tanh(tanh(tanh(tanh(x@W1+B1)@W2+B2)@W3+B3)@W4+B4) for one batch tile."""
    h1 = jnp.tanh(jnp.dot(x_ref[...], w1_ref[...],
                          preferred_element_type=jnp.float32) + b1_ref[...])
    h2 = jnp.tanh(jnp.dot(h1, w2_ref[...],
                          preferred_element_type=jnp.float32) + b2_ref[...])
    h3 = jnp.tanh(jnp.dot(h2, w3_ref[...],
                          preferred_element_type=jnp.float32) + b3_ref[...])
    o_ref[...] = jnp.tanh(jnp.dot(h3, w4_ref[...],
                                  preferred_element_type=jnp.float32)
                          + b4_ref[...])


def cnn_forward(img, prepped, *, batch_tile=256):
    """img: (N, 1, 16, 16) float32 -> (N, 10).  Single fused Pallas kernel."""
    N = img.shape[0]
    x = img.astype(jnp.float32).reshape(N, 256)          # row index = iy*16+ix

    if N <= batch_tile:
        TB, Np = N, N                                    # single full block
    else:
        TB = batch_tile
        Np = ((N + TB - 1) // TB) * TB
        if Np != N:
            x = jnp.pad(x, ((0, Np - N), (0, 0)))
    grid = (Np // TB,)

    flops = 2 * Np * (256 * 768 + 768 * 192 + 192 * 30 + 30 * 10)
    trans = Np * (768 + 192 + 30 + 10)
    bytes_acc = 4 * (Np * 256 + Np * 10
                     + 256 * 768 + 768 * 192 + 192 * 30 + 30 * 10
                     + 768 + 192 + 30 + 10)

    out = pl.pallas_call(
        _fused_cnn_kernel,
        out_shape=jax.ShapeDtypeStruct((Np, 10), jnp.float32),
        grid=grid,
        in_specs=[
            pl.BlockSpec((TB, 256), lambda i: (i, 0)),    # x batch tile
            pl.BlockSpec((256, 768), lambda i: (0, 0)),   # W1 (conv1 folded)
            pl.BlockSpec((1, 768), lambda i: (0, 0)),     # B1 (+pad const)
            pl.BlockSpec((768, 192), lambda i: (0, 0)),   # W2 (grouped conv2)
            pl.BlockSpec((1, 192), lambda i: (0, 0)),     # B2 (+pad const)
            pl.BlockSpec((192, 30), lambda i: (0, 0)),    # W3
            pl.BlockSpec((1, 30), lambda i: (0, 0)),      # B3
            pl.BlockSpec((30, 10), lambda i: (0, 0)),     # W4
            pl.BlockSpec((1, 10), lambda i: (0, 0)),      # B4
        ],
        out_specs=pl.BlockSpec((TB, 10), lambda i: (i, 0)),
        compiler_params=pltpu.CompilerParams(
            dimension_semantics=("parallel",)),
        cost_estimate=pl.CostEstimate(
            flops=flops, transcendentals=trans, bytes_accessed=bytes_acc),
    )(x, prepped["W1"], prepped["B1"], prepped["W2"], prepped["B2"],
      prepped["W3"], prepped["B3"], prepped["W4"], prepped["B4"])
    return out[:N]


# --------------------- offline weight folding (runs once) -------------------

def prepare_weights(params):
    """Fold conv weights, -1 padding and biases into dense matmul form.

    h1 column order: (oy*8 + ox)*12 + c   (NHWC flat, internal only)
    h2 column order: c*16 + oy*4 + ox     (== torch flatten order)
    """
    w1 = np.asarray(params["H1_weights"], dtype=np.float32)   # (12, 1, 5, 5)
    b1 = np.asarray(params["H1_bias"], dtype=np.float32)      # (12, 8, 8)
    w2 = np.asarray(params["H2_weights"], dtype=np.float32)   # (12, 8, 5, 5)
    b2 = np.asarray(params["H2_bias"], dtype=np.float32)      # (12, 4, 4)

    # H1: (N,256) @ W1 + B1  ==  conv2d(pad(img, -1), w1, stride=2) + bias
    W1 = np.zeros((256, 768), np.float32)
    B1 = np.zeros((768,), np.float32)
    for c in range(12):
        for oy in range(8):
            for ox in range(8):
                col = (oy * 8 + ox) * 12 + c
                pad_acc = 0.0
                for ky in range(5):
                    for kx in range(5):
                        iy = 2 * oy + ky - 2
                        ix = 2 * ox + kx - 2
                        w = w1[c, 0, ky, kx]
                        if 0 <= iy < 16 and 0 <= ix < 16:
                            W1[iy * 16 + ix, col] = w
                        else:
                            pad_acc -= w                       # -1 * weight
                B1[col] = pad_acc + b1[c, oy, ox]

    # H2: grouped conv connectivity baked into a block-sparse dense matrix.
    groups = [list(range(0, 8)),             # out ch 0..3  <- in ch 0..7
              list(range(4, 12)),            # out ch 4..7  <- in ch 4..11
              [0, 1, 2, 3, 8, 9, 10, 11]]    # out ch 8..11 <- in ch 0..3,8..11
    W2 = np.zeros((768, 192), np.float32)
    B2 = np.zeros((192,), np.float32)
    for o in range(12):
        chans = groups[o // 4]
        for oy in range(4):
            for ox in range(4):
                col = o * 16 + oy * 4 + ox                    # torch flatten
                pad_acc = 0.0
                for pos, ci in enumerate(chans):
                    for ky in range(5):
                        for kx in range(5):
                            iy = 2 * oy + ky - 2
                            ix = 2 * ox + kx - 2
                            w = w2[o, pos, ky, kx]
                            if 0 <= iy < 8 and 0 <= ix < 8:
                                W2[(iy * 8 + ix) * 12 + ci, col] = w
                            else:
                                pad_acc -= w                   # -1 * weight
                B2[col] = pad_acc + b2[o, oy, ox]

    return dict(
        W1=jnp.asarray(W1), B1=jnp.asarray(B1).reshape(1, 768),
        W2=jnp.asarray(W2), B2=jnp.asarray(B2).reshape(1, 192),
        W3=params["H3_weights"], B3=params["H3_bias"].reshape(1, 30),
        W4=params["out_weights"], B4=params["out_bias"].reshape(1, 10),
    )


# --------------------------------- params ------------------------------------

def init_params(key):
    def init_weights(subkey, fan_in, shape):
        r = jax.random.uniform(subkey, shape, dtype=jnp.float32)  # [0, 1)
        return (r - 0.5) * (1.0 - (-1.0)) * (2.4 / np.sqrt(fan_in))

    k1, k2, k3, k4 = jax.random.split(key, 4)
    return dict(
        H1_weights=init_weights(k1, 5 * 5 * 1, (12, 1, 5, 5)),
        H1_bias=jnp.zeros((12, 8, 8), jnp.float32),
        H2_weights=init_weights(k2, 5 * 5 * 8, (12, 8, 5, 5)),
        H2_bias=jnp.zeros((12, 4, 4), jnp.float32),
        H3_weights=init_weights(k3, 4 * 4 * 12, (4 * 4 * 12, 30)),
        H3_bias=jnp.zeros((30,), jnp.float32),
        out_weights=init_weights(k4, 30, (30, 10)),
        out_bias=-jnp.ones((10,), jnp.float32),
    )


# --------------------------- Pure-JAX reference -----------------------------

def reference_forward(img, params):
    N = img.shape[0]
    x = jnp.pad(img, ((0, 0), (0, 0), (2, 2), (2, 2)), constant_values=-1.0)
    h1 = lax.conv(x, params["H1_weights"], (2, 2), "VALID") + params["H1_bias"][None]
    h1 = jnp.tanh(h1)
    h1p = jnp.pad(h1, ((0, 0), (0, 0), (2, 2), (2, 2)), constant_values=-1.0)
    w2 = params["H2_weights"]
    s1 = lax.conv(h1p[:, 0:8], w2[0:4], (2, 2), "VALID")
    s2 = lax.conv(h1p[:, 4:12], w2[4:8], (2, 2), "VALID")
    s3 = lax.conv(jnp.concatenate([h1p[:, 0:4], h1p[:, 8:12]], axis=1),
                  w2[8:12], (2, 2), "VALID")
    h2 = jnp.tanh(jnp.concatenate([s1, s2, s3], axis=1) + params["H2_bias"][None])
    h2f = h2.reshape(N, -1)
    h3 = jnp.tanh(h2f @ params["H3_weights"] + params["H3_bias"])
    return jnp.tanh(h3 @ params["out_weights"] + params["out_bias"])


# --------------------------------- main --------------------------------------

if __name__ == "__main__":
    key = jax.random.PRNGKey(0)
    pkey, xkey = jax.random.split(key)
    params = init_params(pkey)
    prepped = prepare_weights(params)          # built once, outside hot path

    img = jax.random.normal(xkey, (2, 1, 16, 16), dtype=jnp.float32)

    fwd = jax.jit(cnn_forward)
    out = jax.block_until_ready(fwd(img, prepped))
    ref = jax.block_until_ready(reference_forward(img, params))

    assert out.shape == (2, 10), out.shape
    np.testing.assert_allclose(np.asarray(out), np.asarray(ref),
                               rtol=1e-5, atol=1e-5)
    print("KERNEL_OK")
</pallas_src>

<mosaic_0001>
module attributes {stable_mosaic.version = 11 : i64} {
  func.func @_fused_cnn_kernel(%arg0: i32, %arg1: memref<2x256xf32, #tpu.memory_space<vmem>>, %arg2: memref<256x768xf32, #tpu.memory_space<vmem>>, %arg3: memref<1x768xf32, #tpu.memory_space<vmem>>, %arg4: memref<768x192xf32, #tpu.memory_space<vmem>>, %arg5: memref<1x192xf32, #tpu.memory_space<vmem>>, %arg6: memref<192x30xf32, #tpu.memory_space<vmem>>, %arg7: memref<1x30xf32, #tpu.memory_space<vmem>>, %arg8: memref<30x10xf32, #tpu.memory_space<vmem>>, %arg9: memref<1x10xf32, #tpu.memory_space<vmem>>, %arg10: memref<2x10xf32, #tpu.memory_space<vmem>>) attributes {dimension_semantics = [#tpu.dimension_semantics<parallel>], iteration_bounds = array<i64: 1>, scalar_prefetch = 0 : i64, scratch_operands = 0 : i64, tpu.core_type = #tpu.core_type<tc>, window_params = [{transform_indices = @transform_0, window_bounds = array<i64: 2, 256>}, {pipeline_mode = #tpu.pipeline_mode<synchronous>, transform_indices = @transform_1, window_bounds = array<i64: 256, 768>}, {pipeline_mode = #tpu.pipeline_mode<synchronous>, transform_indices = @transform_2, window_bounds = array<i64: 1, 768>}, {pipeline_mode = #tpu.pipeline_mode<synchronous>, transform_indices = @transform_3, window_bounds = array<i64: 768, 192>}, {pipeline_mode = #tpu.pipeline_mode<synchronous>, transform_indices = @transform_4, window_bounds = array<i64: 1, 192>}, {pipeline_mode = #tpu.pipeline_mode<synchronous>, transform_indices = @transform_5, window_bounds = array<i64: 192, 30>}, {pipeline_mode = #tpu.pipeline_mode<synchronous>, transform_indices = @transform_6, window_bounds = array<i64: 1, 30>}, {pipeline_mode = #tpu.pipeline_mode<synchronous>, transform_indices = @transform_7, window_bounds = array<i64: 30, 10>}, {pipeline_mode = #tpu.pipeline_mode<synchronous>, transform_indices = @transform_8, window_bounds = array<i64: 1, 10>}, {transform_indices = @transform_9, window_bounds = array<i64: 2, 10>}]} {
    %c0 = arith.constant 0 : index
    %c0_0 = arith.constant 0 : index
    %0 = vector.load %arg1[%c0, %c0_0] : memref<2x256xf32, #tpu.memory_space<vmem>>, vector<2x256xf32>
    %c0_1 = arith.constant 0 : index
    %c0_2 = arith.constant 0 : index
    %1 = vector.load %arg2[%c0_1, %c0_2] : memref<256x768xf32, #tpu.memory_space<vmem>>, vector<256x768xf32>
    %cst = arith.constant dense<0.000000e+00> : vector<2x768xf32>
    %2 = tpu.matmul %0, %1, %cst {dimension_numbers = #tpu.dot_dimension_numbers<[1], [0], [0], [1], [0, 0, 1, 1], [], []>} : vector<2x256xf32>, vector<256x768xf32>, vector<2x768xf32> -> vector<2x768xf32>
    %c0_3 = arith.constant 0 : index
    %c0_4 = arith.constant 0 : index
    %3 = vector.load %arg3[%c0_3, %c0_4] : memref<1x768xf32, #tpu.memory_space<vmem>>, vector<1x768xf32>
    %4 = vector.broadcast %3 : vector<1x768xf32> to vector<2x768xf32>
    %5 = arith.addf %2, %4 : vector<2x768xf32>
    %6 = math.tanh %5 : vector<2x768xf32>
    %c0_5 = arith.constant 0 : index
    %c0_6 = arith.constant 0 : index
    %7 = vector.load %arg4[%c0_5, %c0_6] : memref<768x192xf32, #tpu.memory_space<vmem>>, vector<768x192xf32>
    %cst_7 = arith.constant dense<0.000000e+00> : vector<2x192xf32>
    %8 = tpu.matmul %6, %7, %cst_7 {dimension_numbers = #tpu.dot_dimension_numbers<[1], [0], [0], [1], [0, 0, 1, 1], [], []>} : vector<2x768xf32>, vector<768x192xf32>, vector<2x192xf32> -> vector<2x192xf32>
    %c0_8 = arith.constant 0 : index
    %c0_9 = arith.constant 0 : index
    %9 = vector.load %arg5[%c0_8, %c0_9] : memref<1x192xf32, #tpu.memory_space<vmem>>, vector<1x192xf32>
    %10 = vector.broadcast %9 : vector<1x192xf32> to vector<2x192xf32>
    %11 = arith.addf %8, %10 : vector<2x192xf32>
    %12 = math.tanh %11 : vector<2x192xf32>
    %c0_10 = arith.constant 0 : index
    %c0_11 = arith.constant 0 : index
    %13 = vector.load %arg6[%c0_10, %c0_11] : memref<192x30xf32, #tpu.memory_space<vmem>>, vector<192x30xf32>
    %cst_12 = arith.constant dense<0.000000e+00> : vector<2x30xf32>
    %14 = tpu.matmul %12, %13, %cst_12 {dimension_numbers = #tpu.dot_dimension_numbers<[1], [0], [0], [1], [0, 0, 1, 1], [], []>} : vector<2x192xf32>, vector<192x30xf32>, vector<2x30xf32> -> vector<2x30xf32>
    %c0_13 = arith.constant 0 : index
    %c0_14 = arith.constant 0 : index
    %15 = vector.load %arg7[%c0_13, %c0_14] : memref<1x30xf32, #tpu.memory_space<vmem>>, vector<1x30xf32>
    %16 = vector.broadcast %15 : vector<1x30xf32> to vector<2x30xf32>
    %17 = arith.addf %14, %16 : vector<2x30xf32>
    %18 = math.tanh %17 : vector<2x30xf32>
    %c0_15 = arith.constant 0 : index
    %c0_16 = arith.constant 0 : index
    %19 = vector.load %arg8[%c0_15, %c0_16] : memref<30x10xf32, #tpu.memory_space<vmem>>, vector<30x10xf32>
    %cst_17 = arith.constant dense<0.000000e+00> : vector<2x10xf32>
    %20 = tpu.matmul %18, %19, %cst_17 {dimension_numbers = #tpu.dot_dimension_numbers<[1], [0], [0], [1], [0, 0, 1, 1], [], []>} : vector<2x30xf32>, vector<30x10xf32>, vector<2x10xf32> -> vector<2x10xf32>
    %c0_18 = arith.constant 0 : index
    %c0_19 = arith.constant 0 : index
    %21 = vector.load %arg9[%c0_18, %c0_19] : memref<1x10xf32, #tpu.memory_space<vmem>>, vector<1x10xf32>
    %22 = vector.broadcast %21 : vector<1x10xf32> to vector<2x10xf32>
    %23 = arith.addf %20, %22 : vector<2x10xf32>
    %24 = math.tanh %23 : vector<2x10xf32>
    %c0_20 = arith.constant 0 : index
    %c0_21 = arith.constant 0 : index
    %25 = vector.load %arg10[%c0_20, %c0_21] : memref<2x10xf32, #tpu.memory_space<vmem>>, vector<2x10xf32>
    tpu.vector_store %arg10[%c0_20, %c0_21], %24 {strides = array<i32>} : memref<2x10xf32, #tpu.memory_space<vmem>>, vector<2x10xf32>,
    return
  }
  func.func @transform_0(%arg0: i32) -> (i32, i32) {
    %c0_i32 = arith.constant 0 : i32
    %c0_i32_0 = arith.constant 0 : i32
    return %arg0, %c0_i32 : i32, i32
  }
  func.func @transform_1(%arg0: i32) -> (i32, i32) {
    %c0_i32 = arith.constant 0 : i32
    %c0_i32_0 = arith.constant 0 : i32
    %c0_i32_1 = arith.constant 0 : i32
    return %c0_i32, %c0_i32_0 : i32, i32
  }
  func.func @transform_2(%arg0: i32) -> (i32, i32) {
    %c0_i32 = arith.constant 0 : i32
    %c0_i32_0 = arith.constant 0 : i32
    %c0_i32_1 = arith.constant 0 : i32
    return %c0_i32, %c0_i32_0 : i32, i32
  }
  func.func @transform_3(%arg0: i32) -> (i32, i32) {
    %c0_i32 = arith.constant 0 : i32
    %c0_i32_0 = arith.constant 0 : i32
    %c0_i32_1 = arith.constant 0 : i32
    return %c0_i32, %c0_i32_0 : i32, i32
  }
  func.func @transform_4(%arg0: i32) -> (i32, i32) {
    %c0_i32 = arith.constant 0 : i32
    %c0_i32_0 = arith.constant 0 : i32
    %c0_i32_1 = arith.constant 0 : i32
    return %c0_i32, %c0_i32_0 : i32, i32
  }
  func.func @transform_5(%arg0: i32) -> (i32, i32) {
    %c0_i32 = arith.constant 0 : i32
    %c0_i32_0 = arith.constant 0 : i32
    %c0_i32_1 = arith.constant 0 : i32
    return %c0_i32, %c0_i32_0 : i32, i32
  }
  func.func @transform_6(%arg0: i32) -> (i32, i32) {
    %c0_i32 = arith.constant 0 : i32
    %c0_i32_0 = arith.constant 0 : i32
    %c0_i32_1 = arith.constant 0 : i32
    return %c0_i32, %c0_i32_0 : i32, i32
  }
  func.func @transform_7(%arg0: i32) -> (i32, i32) {
    %c0_i32 = arith.constant 0 : i32
    %c0_i32_0 = arith.constant 0 : i32
    %c0_i32_1 = arith.constant 0 : i32
    return %c0_i32, %c0_i32_0 : i32, i32
  }
  func.func @transform_8(%arg0: i32) -> (i32, i32) {
    %c0_i32 = arith.constant 0 : i32
    %c0_i32_0 = arith.constant 0 : i32
    %c0_i32_1 = arith.constant 0 : i32
    return %c0_i32, %c0_i32_0 : i32, i32
  }
  func.func @transform_9(%arg0: i32) -> (i32, i32) {
    %c0_i32 = arith.constant 0 : i32
    %c0_i32_0 = arith.constant 0 : i32
    return %arg0, %c0_i32 : i32, i32
  }
}

</mosaic_0001>

<llo_original>
// kernel: cnn_forward.1
$region0: #{cnn_forward.1}
  #allocation0 [shape = 'u32[]', space=smem, size = 0x4, offset = 0x4, fixed_abs, tag = 'smem constant byte address 0x4 - core index']
  #allocation1 [shape = 'u32[144,128]{1,0:T(1,128)}', space=vmem, size = 0x12000, scoped, tag = 'internal scratch']
  %s0 = inlined_call_operand.vmem [shape: f32[2,256], index: 0, kind: input, shape index: {}]
  %s1 = inlined_call_operand.vmem [shape: f32[256,768], index: 1, kind: input, shape index: {}]
  %s2 = inlined_call_operand.vmem [shape: f32[1,768], index: 2, kind: input, shape index: {}]
  %s3 = inlined_call_operand.vmem [shape: f32[768,192], index: 3, kind: input, shape index: {}]
  %s4 = inlined_call_operand.vmem [shape: f32[1,192], index: 4, kind: input, shape index: {}]
  %s5 = inlined_call_operand.vmem [shape: f32[192,30], index: 5, kind: input, shape index: {}]
  %s6 = inlined_call_operand.vmem [shape: f32[1,30], index: 6, kind: input, shape index: {}]
  %s7 = inlined_call_operand.vmem [shape: f32[30,10], index: 7, kind: input, shape index: {}]
  %s8 = inlined_call_operand.vmem [shape: f32[1,10], index: 8, kind: input, shape index: {}]
  %s9 = inlined_call_operand.hbm [shape: f32[2,10], index: 9, kind: output, shape index: {}]
  %s10 = sld [smem:[#allocation0]]
  $region46: #{cnn_forward.1} parent=0
    _
  %s12 = ssub.s32 1, %s10
  %s13 = scalar_select 0, %s12, %s10
  $region1: #{cnn_forward.1} parent=0
    #allocation2 [shape = 'u8[1024]{0}', space=vmem, size = 0x400, scoped, tag = 'output window, operand 0, single buffered']
    #allocation3 [shape = 's32[1]{0}', space=sflag, size = 0x4, scoped, tag = 'scoped memory for cnn_forward.1']
    %14 = vsyncpa [#allocation3], 0
    // Predicated region
    $region2: #{cnn_forward.1} parent=1 // pred_check
      _
    $region3: #{cnn_forward.1} parent=1 // pred_check_branch
      %16 = sbr.rel (0) target = $region5
    $region4: #{cnn_forward.1} parent=1 // pred_region
      _
    $region5: #{cnn_forward.1} parent=1 // pred_fallthru
      _
    // Predicated region
    $region6: #{cnn_forward.1} parent=1 // pred_check
      _
    $region7: #{cnn_forward.1} parent=1 // pred_check_branch
      %18 = sbr.rel (0) target = $region9
    $region8: #{cnn_forward.1} parent=1 // pred_region
      _
    $region9: #{cnn_forward.1} parent=1 // pred_fallthru
      _
    // Predicated region
    $region10: #{cnn_forward.1} parent=1 // pred_check
      _
    $region11: #{cnn_forward.1} parent=1 // pred_check_branch
      %20 = sbr.rel (0) target = $region13
    $region12: #{cnn_forward.1} parent=1 // pred_region
      _
    $region13: #{cnn_forward.1} parent=1 // pred_fallthru
      _
    // Predicated region
    $region14: #{cnn_forward.1} parent=1 // pred_check
      _
    $region15: #{cnn_forward.1} parent=1 // pred_check_branch
      %22 = sbr.rel (0) target = $region17
    $region16: #{cnn_forward.1} parent=1 // pred_region
      _
    $region17: #{cnn_forward.1} parent=1 // pred_fallthru
      _
    // Predicated region
    $region18: #{cnn_forward.1} parent=1 // pred_check
      _
    $region19: #{cnn_forward.1} parent=1 // pred_check_branch
      %24 = sbr.rel (0) target = $region21
    $region20: #{cnn_forward.1} parent=1 // pred_region
      _
    $region21: #{cnn_forward.1} parent=1 // pred_fallthru
      _
    // Predicated region
    $region22: #{cnn_forward.1} parent=1 // pred_check
      _
    $region23: #{cnn_forward.1} parent=1 // pred_check_branch
      %26 = sbr.rel (0) target = $region25
    $region24: #{cnn_forward.1} parent=1 // pred_region
      _
    $region25: #{cnn_forward.1} parent=1 // pred_fallthru
      _
    // Predicated region
    $region26: #{cnn_forward.1} parent=1 // pred_check
      _
    $region27: #{cnn_forward.1} parent=1 // pred_check_branch
      %28 = sbr.rel (0) target = $region29
    $region28: #{cnn_forward.1} parent=1 // pred_region
      _
    $region29: #{cnn_forward.1} parent=1 // pred_fallthru
      _
    // Predicated region
    $region30: #{cnn_forward.1} parent=1 // pred_check
      _
    $region31: #{cnn_forward.1} parent=1 // pred_check_branch
      %30 = sbr.rel (0) target = $region33
    $region32: #{cnn_forward.1} parent=1 // pred_region
      _
    $region33: #{cnn_forward.1} parent=1 // pred_fallthru
      _
    // Predicated region
    $region34: #{cnn_forward.1} parent=1 // pred_check
      _
    $region35: #{cnn_forward.1} parent=1 // pred_check_branch
      %32 = sbr.rel (0) target = $region37
    $region36: #{cnn_forward.1} parent=1 // pred_region
      _
    $region37: #{cnn_forward.1} parent=1 // pred_fallthru
      _
    %v33 = vld [vmem:[%s0] sm:$0xf]
    %v34 = vld [vmem:[%s1] sm:$0xff]
    %v35 = vld [vmem:[%s1 + $0x8] sm:$0xff]
    %v36 = vld [vmem:[%s1 + $0x10] sm:$0xff]
    %v37 = vld [vmem:[%s1 + $0x18] sm:$0xff]
    %v38 = vld [vmem:[%s1 + $0x20] sm:$0xff]
    %v39 = vld [vmem:[%s1 + $0x28] sm:$0xff]
    %v40 = vld [vmem:[%s1 + $0x30] sm:$0xff]
    %v41 = vld [vmem:[%s1 + $0x38] sm:$0xff]
    %v42 = vld [vmem:[%s1 + $0x40] sm:$0xff]
    %v43 = vld [vmem:[%s1 + $0x48] sm:$0xff]
    %v44 = vld [vmem:[%s1 + $0x50] sm:$0xff]
    %v45 = vld [vmem:[%s1 + $0x58] sm:$0xff]
    %v46 = vld [vmem:[%s1 + $0x60] sm:$0xff]
    %v47 = vld [vmem:[%s1 + $0x68] sm:$0xff]
    %v48 = vld [vmem:[%s1 + $0x70] sm:$0xff]
    %v49 = vld [vmem:[%s1 + $0x78] sm:$0xff]
    %v50 = vld [vmem:[%s1 + $0x80] sm:$0xff]
    %v51 = vld [vmem:[%s1 + $0x88] sm:$0xff]
    %v52 = vld [vmem:[%s1 + $0x90] sm:$0xff]
    %v53 = vld [vmem:[%s1 + $0x98] sm:$0xff]
    %v54 = vld [vmem:[%s1 + $0xa0] sm:$0xff]
    %v55 = vld [vmem:[%s1 + $0xa8] sm:$0xff]
    %v56 = vld [vmem:[%s1 + $0xb0] sm:$0xff]
    %v57 = vld [vmem:[%s1 + $0xb8] sm:$0xff]
    %v58 = vld [vmem:[%s1 + $0xc0] sm:$0xff]
    %v59 = vld [vmem:[%s1 + $0xc8] sm:$0xff]
    %v60 = vld [vmem:[%s1 + $0xd0] sm:$0xff]
    %v61 = vld [vmem:[%s1 + $0xd8] sm:$0xff]
    %v62 = vld [vmem:[%s1 + $0xe0] sm:$0xff]
    %v63 = vld [vmem:[%s1 + $0xe8] sm:$0xff]
    %v64 = vld [vmem:[%s1 + $0xf0] sm:$0xff]
    %v65 = vld [vmem:[%s1 + $0xf8] sm:$0xff]
    %v66 = vld [vmem:[%s1 + $0x100] sm:$0xff]
    %v67 = vld [vmem:[%s1 + $0x108] sm:$0xff]
    %v68 = vld [vmem:[%s1 + $0x110] sm:$0xff]
    %v69 = vld [vmem:[%s1 + $0x118] sm:$0xff]
    %v70 = vld [vmem:[%s1 + $0x120] sm:$0xff]
    %v71 = vld [vmem:[%s1 + $0x128] sm:$0xff]
    %v72 = vld [vmem:[%s1 + $0x130] sm:$0xff]
    %v73 = vld [vmem:[%s1 + $0x138] sm:$0xff]
    %v74 = vld [vmem:[%s1 + $0x140] sm:$0xff]
    %v75 = vld [vmem:[%s1 + $0x148] sm:$0xff]
    %v76 = vld [vmem:[%s1 + $0x150] sm:$0xff]
    %v77 = vld [vmem:[%s1 + $0x158] sm:$0xff]
    %v78 = vld [vmem:[%s1 + $0x160] sm:$0xff]
    %v79 = vld [vmem:[%s1 + $0x168] sm:$0xff]
    %v80 = vld [vmem:[%s1 + $0x170] sm:$0xff]
    %v81 = vld [vmem:[%s1 + $0x178] sm:$0xff]
    %v82 = vld [vmem:[%s1 + $0x180] sm:$0xff]
    %v83 = vld [vmem:[%s1 + $0x188] sm:$0xff]
    %v84 = vld [vmem:[%s1 + $0x190] sm:$0xff]
    %v85 = vld [vmem:[%s1 + $0x198] sm:$0xff]
    %v86 = vld [vmem:[%s1 + $0x1a0] sm:$0xff]
    %v87 = vld [vmem:[%s1 + $0x1a8] sm:$0xff]
    %v88 = vld [vmem:[%s1 + $0x1b0] sm:$0xff]
    %v89 = vld [vmem:[%s1 + $0x1b8] sm:$0xff]
    %v90 = vld [vmem:[%s1 + $0x1c0] sm:$0xff]
    %v91 = vld [vmem:[%s1 + $0x1c8] sm:$0xff]
    %v92 = vld [vmem:[%s1 + $0x1d0] sm:$0xff]
    %v93 = vld [vmem:[%s1 + $0x1d8] sm:$0xff]
    %v94 = vld [vmem:[%s1 + $0x1e0] sm:$0xff]
    %v95 = vld [vmem:[%s1 + $0x1e8] sm:$0xff]
    %v96 = vld [vmem:[%s1 + $0x1f0] sm:$0xff]
    %v97 = vld [vmem:[%s1 + $0x1f8] sm:$0xff]
    %v98 = vld [vmem:[%s1 + $0x200] sm:$0xff]
    %v99 = vld [vmem:[%s1 + $0x208] sm:$0xff]
    %v100 = vld [vmem:[%s1 + $0x210] sm:$0xff]
    %v101 = vld [vmem:[%s1 + $0x218] sm:$0xff]
    %v102 = vld [vmem:[%s1 + $0x220] sm:$0xff]
    %v103 = vld [vmem:[%s1 + $0x228] sm:$0xff]
    %v104 = vld [vmem:[%s1 + $0x230] sm:$0xff]
    %v105 = vld [vmem:[%s1 + $0x238] sm:$0xff]
    %v106 = vld [vmem:[%s1 + $0x240] sm:$0xff]
    %v107 = vld [vmem:[%s1 + $0x248] sm:$0xff]
    %v108 = vld [vmem:[%s1 + $0x250] sm:$0xff]
    %v109 = vld [vmem:[%s1 + $0x258] sm:$0xff]
    %v110 = vld [vmem:[%s1 + $0x260] sm:$0xff]
    %v111 = vld [vmem:[%s1 + $0x268] sm:$0xff]
    %v112 = vld [vmem:[%s1 + $0x270] sm:$0xff]
    %v113 = vld [vmem:[%s1 + $0x278] sm:$0xff]
    %v114 = vld [vmem:[%s1 + $0x280] sm:$0xff]
    %v115 = vld [vmem:[%s1 + $0x288] sm:$0xff]
    %v116 = vld [vmem:[%s1 + $0x290] sm:$0xff]
    %v117 = vld [vmem:[%s1 + $0x298] sm:$0xff]
    %v118 = vld [vmem:[%s1 + $0x2a0] sm:$0xff]
    %v119 = vld [vmem:[%s1 + $0x2a8] sm:$0xff]
    %v120 = vld [vmem:[%s1 + $0x2b0] sm:$0xff]
    %v121 = vld [vmem:[%s1 + $0x2b8] sm:$0xff]
    %v122 = vld [vmem:[%s1 + $0x2c0] sm:$0xff]
    %v123 = vld [vmem:[%s1 + $0x2c8] sm:$0xff]
    %v124 = vld [vmem:[%s1 + $0x2d0] sm:$0xff]
    %v125 = vld [vmem:[%s1 + $0x2d8] sm:$0xff]
    %v126 = vld [vmem:[%s1 + $0x2e0] sm:$0xff]
    %v127 = vld [vmem:[%s1 + $0x2e8] sm:$0xff]
    %v128 = vld [vmem:[%s1 + $0x2f0] sm:$0xff]
    %v129 = vld [vmem:[%s1 + $0x2f8] sm:$0xff]
    %v130 = vld [vmem:[%s1 + $0x300] sm:$0xff]
    %v131 = vld [vmem:[%s1 + $0x308] sm:$0xff]
    %v132 = vld [vmem:[%s1 + $0x310] sm:$0xff]
    %v133 = vld [vmem:[%s1 + $0x318] sm:$0xff]
    %v134 = vld [vmem:[%s1 + $0x320] sm:$0xff]
    %v135 = vld [vmem:[%s1 + $0x328] sm:$0xff]
    %v136 = vld [vmem:[%s1 + $0x330] sm:$0xff]
    %v137 = vld [vmem:[%s1 + $0x338] sm:$0xff]
    %v138 = vld [vmem:[%s1 + $0x340] sm:$0xff]
    %v139 = vld [vmem:[%s1 + $0x348] sm:$0xff]
    %v140 = vld [vmem:[%s1 + $0x350] sm:$0xff]
    %v141 = vld [vmem:[%s1 + $0x358] sm:$0xff]
    %v142 = vld [vmem:[%s1 + $0x360] sm:$0xff]
    %v143 = vld [vmem:[%s1 + $0x368] sm:$0xff]
    %v144 = vld [vmem:[%s1 + $0x370] sm:$0xff]
    %v145 = vld [vmem:[%s1 + $0x378] sm:$0xff]
    %v146 = vld [vmem:[%s1 + $0x380] sm:$0xff]
    %v147 = vld [vmem:[%s1 + $0x388] sm:$0xff]
    %v148 = vld [vmem:[%s1 + $0x390] sm:$0xff]
    %v149 = vld [vmem:[%s1 + $0x398] sm:$0xff]
    %v150 = vld [vmem:[%s1 + $0x3a0] sm:$0xff]
    %v151 = vld [vmem:[%s1 + $0x3a8] sm:$0xff]
    %v152 = vld [vmem:[%s1 + $0x3b0] sm:$0xff]
    %v153 = vld [vmem:[%s1 + $0x3b8] sm:$0xff]
    %v154 = vld [vmem:[%s1 + $0x3c0] sm:$0xff]
    %v155 = vld [vmem:[%s1 + $0x3c8] sm:$0xff]
    %v156 = vld [vmem:[%s1 + $0x3d0] sm:$0xff]
    %v157 = vld [vmem:[%s1 + $0x3d8] sm:$0xff]
    %v158 = vld [vmem:[%s1 + $0x3e0] sm:$0xff]
    %v159 = vld [vmem:[%s1 + $0x3e8] sm:$0xff]
    %v160 = vld [vmem:[%s1 + $0x3f0] sm:$0xff]
    %v161 = vld [vmem:[%s1 + $0x3f8] sm:$0xff]
    %v162 = vld [vmem:[%s1 + $0x400] sm:$0xff]
    %v163 = vld [vmem:[%s1 + $0x408] sm:$0xff]
    %v164 = vld [vmem:[%s1 + $0x410] sm:$0xff]
    %v165 = vld [vmem:[%s1 + $0x418] sm:$0xff]
    %v166 = vld [vmem:[%s1 + $0x420] sm:$0xff]
    %v167 = vld [vmem:[%s1 + $0x428] sm:$0xff]
    %v168 = vld [vmem:[%s1 + $0x430] sm:$0xff]
    %v169 = vld [vmem:[%s1 + $0x438] sm:$0xff]
    %v170 = vld [vmem:[%s1 + $0x440] sm:$0xff]
    %v171 = vld [vmem:[%s1 + $0x448] sm:$0xff]
    %v172 = vld [vmem:[%s1 + $0x450] sm:$0xff]
    %v173 = vld [vmem:[%s1 + $0x458] sm:$0xff]
    %v174 = vld [vmem:[%s1 + $0x460] sm:$0xff]
    %v175 = vld [vmem:[%s1 + $0x468] sm:$0xff]
    %v176 = vld [vmem:[%s1 + $0x470] sm:$0xff]
    %v177 = vld [vmem:[%s1 + $0x478] sm:$0xff]
    %v178 = vld [vmem:[%s1 + $0x480] sm:$0xff]
    %v179 = vld [vmem:[%s1 + $0x488] sm:$0xff]
    %v180 = vld [vmem:[%s1 + $0x490] sm:$0xff]
    %v181 = vld [vmem:[%s1 + $0x498] sm:$0xff]
    %v182 = vld [vmem:[%s1 + $0x4a0] sm:$0xff]
    %v183 = vld [vmem:[%s1 + $0x4a8] sm:$0xff]
    %v184 = vld [vmem:[%s1 + $0x4b0] sm:$0xff]
    %v185 = vld [vmem:[%s1 + $0x4b8] sm:$0xff]
    %v186 = vld [vmem:[%s1 + $0x4c0] sm:$0xff]
    %v187 = vld [vmem:[%s1 + $0x4c8] sm:$0xff]
    %v188 = vld [vmem:[%s1 + $0x4d0] sm:$0xff]
    %v189 = vld [vmem:[%s1 + $0x4d8] sm:$0xff]
    %v190 = vld [vmem:[%s1 + $0x4e0] sm:$0xff]
    %v191 = vld [vmem:[%s1 + $0x4e8] sm:$0xff]
    %v192 = vld [vmem:[%s1 + $0x4f0] sm:$0xff]
    %v193 = vld [vmem:[%s1 + $0x4f8] sm:$0xff]
    %v194 = vld [vmem:[%s1 + $0x500] sm:$0xff]
    %v195 = vld [vmem:[%s1 + $0x508] sm:$0xff]
    %v196 = vld [vmem:[%s1 + $0x510] sm:$0xff]
    %v197 = vld [vmem:[%s1 + $0x518] sm:$0xff]
    %v198 = vld [vmem:[%s1 + $0x520] sm:$0xff]
    %v199 = vld [vmem:[%s1 + $0x528] sm:$0xff]
    %v200 = vld [vmem:[%s1 + $0x530] sm:$0xff]
    %v201 = vld [vmem:[%s1 + $0x538] sm:$0xff]
    %v202 = vld [vmem:[%s1 + $0x540] sm:$0xff]
    %v203 = vld [vmem:[%s1 + $0x548] sm:$0xff]
    %v204 = vld [vmem:[%s1 + $0x550] sm:$0xff]
    %v205 = vld [vmem:[%s1 + $0x558] sm:$0xff]
    %v206 = vld [vmem:[%s1 + $0x560] sm:$0xff]
    %v207 = vld [vmem:[%s1 + $0x568] sm:$0xff]
    %v208 = vld [vmem:[%s1 + $0x570] sm:$0xff]
    %v209 = vld [vmem:[%s1 + $0x578] sm:$0xff]
    %v210 = vld [vmem:[%s1 + $0x580] sm:$0xff]
    %v211 = vld [vmem:[%s1 + $0x588] sm:$0xff]
    %v212 = vld [vmem:[%s1 + $0x590] sm:$0xff]
    %v213 = vld [vmem:[%s1 + $0x598] sm:$0xff]
    %v214 = vld [vmem:[%s1 + $0x5a0] sm:$0xff]
    %v215 = vld [vmem:[%s1 + $0x5a8] sm:$0xff]
    %v216 = vld [vmem:[%s1 + $0x5b0] sm:$0xff]
    %v217 = vld [vmem:[%s1 + $0x5b8] sm:$0xff]
    %v218 = vld [vmem:[%s1 + $0x5c0] sm:$0xff]
    %v219 = vld [vmem:[%s1 + $0x5c8] sm:$0xff]
    %v220 = vld [vmem:[%s1 + $0x5d0] sm:$0xff]
    %v221 = vld [vmem:[%s1 + $0x5d8] sm:$0xff]
    %v222 = vld [vmem:[%s1 + $0x5e0] sm:$0xff]
    %v223 = vld [vmem:[%s1 + $0x5e8] sm:$0xff]
    %v224 = vld [vmem:[%s1 + $0x5f0] sm:$0xff]
    %v225 = vld [vmem:[%s1 + $0x5f8] sm:$0xff]
    %v226 = vld [vmem:[%s2] sm:$0x3f]
    %v228 = vlaneseq
    %v229 = vshrl.u32 %v228, 7
    %v230 = vsub.s32 0, %v229
    %v231 = vrot.slane %v226, %v230
    %v232 = vlaneseq
    %v233 = vshrl.u32 %v232, 7
    %v234 = vsub.s32 1, %v233
    %v235 = vrot.slane %v226, %v234
    %v236 = vlaneseq
    %v237 = vshrl.u32 %v236, 7
    %v238 = vsub.s32 2, %v237
    %v239 = vrot.slane %v226, %v238
    %v240 = vlaneseq
    %v241 = vshrl.u32 %v240, 7
    %v242 = vsub.s32 3, %v241
    %v243 = vrot.slane %v226, %v242
    %v244 = vlaneseq
    %v245 = vshrl.u32 %v244, 7
    %v246 = vsub.s32 4, %v245
    %v247 = vrot.slane %v226, %v246
    %v248 = vlaneseq
    %v249 = vshrl.u32 %v248, 7
    %v250 = vsub.s32 5, %v249
    %v251 = vrot.slane %v226, %v250
    %v260 = vunpack.c.l.s4 1983009808
    %v261 = vunpack.c.0.s8 %v260
    %v262 = vlaneseq
    %v263 = vshrl.u32 %v262, 7
    %v264 = vsub.s32 %v261, %v263
    %v265 = vrot.slane %v33, %v264
    %v266 = vcombine.high %v265, %v265
    %269 = vmatprep.subr.mxu0 %v35
    %270 = vmatpush1.msra.mxu0 %v34
    %271 = vmatprep.subr.mxu0 %v41
    %272 = vmatpush1.msra.mxu0 %v40
    %273 = vmatprep.subr.mxu0 %v47
    %274 = vmatpush1.msra.mxu0 %v46
    %275 = vmatprep.subr.mxu0 %v53
    %276 = vmatpush1.msra.mxu0 %v52
    %277 = vmatprep.subr.mxu0 %v59
    %278 = vmatpush1.msra.mxu0 %v58
    %279 = vmatprep.subr.mxu0 %v65
    %280 = vmatpush1.msra.mxu0 %v64
    %281 = vmatprep.subr.mxu0 %v71
    %282 = vmatpush1.msra.mxu0 %v70
    %283 = vmatprep.subr.mxu0 %v77
    %284 = vmatpush1.msra.mxu0 %v76
    %285 = vmatprep.subr.mxu0 %v83
    %286 = vmatpush1.msra.mxu0 %v82
    %287 = vmatprep.subr.mxu0 %v89
    %288 = vmatpush1.msra.mxu0 %v88
    %289 = vmatprep.subr.mxu0 %v95
    %290 = vmatpush1.msra.mxu0 %v94
    %291 = vmatprep.subr.mxu0 %v101
    %292 = vmatpush1.msra.mxu0 %v100
    %293 = vmatprep.subr.mxu0 %v107
    %294 = vmatpush1.msra.mxu0 %v106
    %295 = vmatprep.subr.mxu0 %v113
    %296 = vmatpush1.msra.mxu0 %v112
    %297 = vmatprep.subr.mxu0 %v119
    %298 = vmatpush1.msra.mxu0 %v118
    %299 = vmatprep.subr.mxu0 %v125
    %300 = vmatpush1.msra.mxu0 %v124
    %301 = vmatprep.subr.mxu0 %v131
    %302 = vmatpush1.msra.mxu0 %v130
    %303 = vmatprep.subr.mxu0 %v137
    %304 = vmatpush1.msra.mxu0 %v136
    %305 = vmatprep.subr.mxu0 %v143
    %306 = vmatpush1.msra.mxu0 %v142
    %307 = vmatprep.subr.mxu0 %v149
    %308 = vmatpush1.msra.mxu0 %v148
    %309 = vmatprep.subr.mxu0 %v155
    %310 = vmatpush1.msra.mxu0 %v154
    %311 = vmatprep.subr.mxu0 %v161
    %312 = vmatpush1.msra.mxu0 %v160
    %313 = vmatprep.subr.mxu0 %v167
    %314 = vmatpush1.msra.mxu0 %v166
    %315 = vmatprep.subr.mxu0 %v173
    %316 = vmatpush1.msra.mxu0 %v172
    %317 = vmatprep.subr.mxu0 %v179
    %318 = vmatpush1.msra.mxu0 %v178
    %319 = vmatprep.subr.mxu0 %v185
    %320 = vmatpush1.msra.mxu0 %v184
    %321 = vmatprep.subr.mxu0 %v191
    %322 = vmatpush1.msra.mxu0 %v190
    %323 = vmatprep.subr.mxu0 %v197
    %324 = vmatpush1.msra.mxu0 %v196
    %325 = vmatprep.subr.mxu0 %v203
    %326 = vmatpush1.msra.mxu0 %v202
    %327 = vmatprep.subr.mxu0 %v209
    %328 = vmatpush1.msra.mxu0 %v208
    %329 = vmatprep.subr.mxu0 %v215
    %330 = vmatpush1.msra.mxu0 %v214
    %331 = vmatprep.subr.mxu0 %v221
    %332 = vmatpush1.msra.mxu0 %v220
    %333 = vmatprep.mubr.f32.mxu0 %v266
    %334 = vmatmul.mubr.f32.gmra.mrb[0].mxu0 %v265
    %v335 = vpop.f32.mrb[0].mxu0
    %v336 = vadd.f32 %v231, %v335
    %v337 = vpop.f32.mrb[0].mxu0
    %v338 = vadd.f32 %v235, %v337
    %339 = vdwg.mxu0
    %340 = vmatprep.subr.mxu0 %v37
    %341 = vmatpush1.msra.mxu0 %v36
    %342 = vmatprep.subr.mxu0 %v43
    %343 = vmatpush1.msra.mxu0 %v42
    %344 = vmatprep.subr.mxu0 %v49
    %345 = vmatpush1.msra.mxu0 %v48
    %346 = vmatprep.subr.mxu0 %v55
    %347 = vmatpush1.msra.mxu0 %v54
    %348 = vmatprep.subr.mxu0 %v61
    %349 = vmatpush1.msra.mxu0 %v60
    %350 = vmatprep.subr.mxu0 %v67
    %351 = vmatpush1.msra.mxu0 %v66
    %352 = vmatprep.subr.mxu0 %v73
    %353 = vmatpush1.msra.mxu0 %v72
    %354 = vmatprep.subr.mxu0 %v79
    %355 = vmatpush1.msra.mxu0 %v78
    %356 = vmatprep.subr.mxu0 %v85
    %357 = vmatpush1.msra.mxu0 %v84
    %358 = vmatprep.subr.mxu0 %v91
    %359 = vmatpush1.msra.mxu0 %v90
    %360 = vmatprep.subr.mxu0 %v97
    %361 = vmatpush1.msra.mxu0 %v96
    %362 = vmatprep.subr.mxu0 %v103
    %363 = vmatpush1.msra.mxu0 %v102
    %364 = vmatprep.subr.mxu0 %v109
    %365 = vmatpush1.msra.mxu0 %v108
    %366 = vmatprep.subr.mxu0 %v115
    %367 = vmatpush1.msra.mxu0 %v114
    %368 = vmatprep.subr.mxu0 %v121
    %369 = vmatpush1.msra.mxu0 %v120
    %370 = vmatprep.subr.mxu0 %v127
    %371 = vmatpush1.msra.mxu0 %v126
    %372 = vmatprep.subr.mxu0 %v133
    %373 = vmatpush1.msra.mxu0 %v132
    %374 = vmatprep.subr.mxu0 %v139
    %375 = vmatpush1.msra.mxu0 %v138
    %376 = vmatprep.subr.mxu0 %v145
    %377 = vmatpush1.msra.mxu0 %v144
    %378 = vmatprep.subr.mxu0 %v151
    %379 = vmatpush1.msra.mxu0 %v150
    %380 = vmatprep.subr.mxu0 %v157
    %381 = vmatpush1.msra.mxu0 %v156
    %382 = vmatprep.subr.mxu0 %v163
    %383 = vmatpush1.msra.mxu0 %v162
    %384 = vmatprep.subr.mxu0 %v169
    %385 = vmatpush1.msra.mxu0 %v168
    %386 = vmatprep.subr.mxu0 %v175
    %387 = vmatpush1.msra.mxu0 %v174
    %388 = vmatprep.subr.mxu0 %v181
    %389 = vmatpush1.msra.mxu0 %v180
    %390 = vmatprep.subr.mxu0 %v187
    %391 = vmatpush1.msra.mxu0 %v186
    %392 = vmatprep.subr.mxu0 %v193
    %393 = vmatpush1.msra.mxu0 %v192
    %394 = vmatprep.subr.mxu0 %v199
    %395 = vmatpush1.msra.mxu0 %v198
    %396 = vmatprep.subr.mxu0 %v205
    %397 = vmatpush1.msra.mxu0 %v204
    %398 = vmatprep.subr.mxu0 %v211
    %399 = vmatpush1.msra.mxu0 %v210
    %400 = vmatprep.subr.mxu0 %v217
    %401 = vmatpush1.msra.mxu0 %v216
    %402 = vmatprep.subr.mxu0 %v223
    %403 = vmatpush1.msra.mxu0 %v222
    %404 = vmatprep.mubr.f32.mxu0 %v266
    %405 = vmatmul.mubr.f32.gmra.mrb[0].mxu0 %v265
    %v406 = vpop.f32.mrb[0].mxu0
    %v407 = vadd.f32 %v239, %v406
    %v408 = vpop.f32.mrb[0].mxu0
    %v409 = vadd.f32 %v243, %v408
    %410 = vdwg.mxu0
    %411 = vmatprep.subr.mxu0 %v39
    %412 = vmatpush1.msra.mxu0 %v38
    %413 = vmatprep.subr.mxu0 %v45
    %414 = vmatpush1.msra.mxu0 %v44
    %415 = vmatprep.subr.mxu0 %v51
    %416 = vmatpush1.msra.mxu0 %v50
    %417 = vmatprep.subr.mxu0 %v57
    %418 = vmatpush1.msra.mxu0 %v56
    %419 = vmatprep.subr.mxu0 %v63
    %420 = vmatpush1.msra.mxu0 %v62
    %421 = vmatprep.subr.mxu0 %v69
    %422 = vmatpush1.msra.mxu0 %v68
    %423 = vmatprep.subr.mxu0 %v75
    %424 = vmatpush1.msra.mxu0 %v74
    %425 = vmatprep.subr.mxu0 %v81
    %426 = vmatpush1.msra.mxu0 %v80
    %427 = vmatprep.subr.mxu0 %v87
    %428 = vmatpush1.msra.mxu0 %v86
    %429 = vmatprep.subr.mxu0 %v93
    %430 = vmatpush1.msra.mxu0 %v92
    %431 = vmatprep.subr.mxu0 %v99
    %432 = vmatpush1.msra.mxu0 %v98
    %433 = vmatprep.subr.mxu0 %v105
    %434 = vmatpush1.msra.mxu0 %v104
    %435 = vmatprep.subr.mxu0 %v111
    %436 = vmatpush1.msra.mxu0 %v110
    %437 = vmatprep.subr.mxu0 %v117
    %438 = vmatpush1.msra.mxu0 %v116
    %439 = vmatprep.subr.mxu0 %v123
    %440 = vmatpush1.msra.mxu0 %v122
    %441 = vmatprep.subr.mxu0 %v129
    %442 = vmatpush1.msra.mxu0 %v128
    %443 = vmatprep.subr.mxu0 %v135
    %444 = vmatpush1.msra.mxu0 %v134
    %445 = vmatprep.subr.mxu0 %v141
    %446 = vmatpush1.msra.mxu0 %v140
    %447 = vmatprep.subr.mxu0 %v147
    %448 = vmatpush1.msra.mxu0 %v146
    %449 = vmatprep.subr.mxu0 %v153
    %450 = vmatpush1.msra.mxu0 %v152
    %451 = vmatprep.subr.mxu0 %v159
    %452 = vmatpush1.msra.mxu0 %v158
    %453 = vmatprep.subr.mxu0 %v165
    %454 = vmatpush1.msra.mxu0 %v164
    %455 = vmatprep.subr.mxu0 %v171
    %456 = vmatpush1.msra.mxu0 %v170
    %457 = vmatprep.subr.mxu0 %v177
    %458 = vmatpush1.msra.mxu0 %v176
    %459 = vmatprep.subr.mxu0 %v183
    %460 = vmatpush1.msra.mxu0 %v182
    %461 = vmatprep.subr.mxu0 %v189
    %462 = vmatpush1.msra.mxu0 %v188
    %463 = vmatprep.subr.mxu0 %v195
    %464 = vmatpush1.msra.mxu0 %v194
    %465 = vmatprep.subr.mxu0 %v201
    %466 = vmatpush1.msra.mxu0 %v200
    %467 = vmatprep.subr.mxu0 %v207
    %468 = vmatpush1.msra.mxu0 %v206
    %469 = vmatprep.subr.mxu0 %v213
    %470 = vmatpush1.msra.mxu0 %v212
    %471 = vmatprep.subr.mxu0 %v219
    %472 = vmatpush1.msra.mxu0 %v218
    %473 = vmatprep.subr.mxu0 %v225
    %474 = vmatpush1.msra.mxu0 %v224
    %475 = vmatprep.mubr.f32.mxu0 %v266
    %476 = vmatmul.mubr.f32.gmra.mrb[0].mxu0 %v265
    %v477 = vpop.f32.mrb[0].mxu0
    %v478 = vadd.f32 %v247, %v477
    %v479 = vpop.f32.mrb[0].mxu0
    %v480 = vadd.f32 %v251, %v479
    %481 = vdwg.mxu0
    %v482 = vtanh.pop %v336
    %v483 = vtanh.pop %v338
    %v484 = vtanh.pop %v407
    %v485 = vtanh.pop %v409
    %v486 = vtanh.pop %v478
    %v487 = vtanh.pop %v480
    %v488 = vld [vmem:[%s3] sm:$0xff]
    %v489 = vld [vmem:[%s3 + $0x8] sm:$0xff]
    %v490 = vld [vmem:[%s3 + $0x10] sm:$0xff]
    %v491 = vld [vmem:[%s3 + $0x18] sm:$0xff]
    %v492 = vld [vmem:[%s3 + $0x20] sm:$0xff]
    %v493 = vld [vmem:[%s3 + $0x28] sm:$0xff]
    %v494 = vld [vmem:[%s3 + $0x30] sm:$0xff]
    %v495 = vld [vmem:[%s3 + $0x38] sm:$0xff]
    %v496 = vld [vmem:[%s3 + $0x40] sm:$0xff]
    %v497 = vld [vmem:[%s3 + $0x48] sm:$0xff]
    %v498 = vld [vmem:[%s3 + $0x50] sm:$0xff]
    %v499 = vld [vmem:[%s3 + $0x58] sm:$0xff]
    %v500 = vld [vmem:[%s3 + $0x60] sm:$0xff]
    %v501 = vld [vmem:[%s3 + $0x68] sm:$0xff]
    %v502 = vld [vmem:[%s3 + $0x70] sm:$0xff]
    %v503 = vld [vmem:[%s3 + $0x78] sm:$0xff]
    %v504 = vld [vmem:[%s3 + $0x80] sm:$0xff]
    %v505 = vld [vmem:[%s3 + $0x88] sm:$0xff]
    %v506 = vld [vmem:[%s3 + $0x90] sm:$0xff]
    %v507 = vld [vmem:[%s3 + $0x98] sm:$0xff]
    %v508 = vld [vmem:[%s3 + $0xa0] sm:$0xff]
    %v509 = vld [vmem:[%s3 + $0xa8] sm:$0xff]
    %v510 = vld [vmem:[%s3 + $0xb0] sm:$0xff]
    %v511 = vld [vmem:[%s3 + $0xb8] sm:$0xff]
    %v512 = vld [vmem:[%s3 + $0xc0] sm:$0xff]
    %v513 = vld [vmem:[%s3 + $0xc8] sm:$0xff]
    %v514 = vld [vmem:[%s3 + $0xd0] sm:$0xff]
    %v515 = vld [vmem:[%s3 + $0xd8] sm:$0xff]
    %v516 = vld [vmem:[%s3 + $0xe0] sm:$0xff]
    %v517 = vld [vmem:[%s3 + $0xe8] sm:$0xff]
    %v518 = vld [vmem:[%s3 + $0xf0] sm:$0xff]
    %v519 = vld [vmem:[%s3 + $0xf8] sm:$0xff]
    %v520 = vld [vmem:[%s3 + $0x100] sm:$0xff]
    %v521 = vld [vmem:[%s3 + $0x108] sm:$0xff]
    %v522 = vld [vmem:[%s3 + $0x110] sm:$0xff]
    %v523 = vld [vmem:[%s3 + $0x118] sm:$0xff]
    %v524 = vld [vmem:[%s3 + $0x120] sm:$0xff]
    %v525 = vld [vmem:[%s3 + $0x128] sm:$0xff]
    %v526 = vld [vmem:[%s3 + $0x130] sm:$0xff]
    %v527 = vld [vmem:[%s3 + $0x138] sm:$0xff]
    %v528 = vld [vmem:[%s3 + $0x140] sm:$0xff]
    %v529 = vld [vmem:[%s3 + $0x148] sm:$0xff]
    %v530 = vld [vmem:[%s3 + $0x150] sm:$0xff]
    %v531 = vld [vmem:[%s3 + $0x158] sm:$0xff]
    %v532 = vld [vmem:[%s3 + $0x160] sm:$0xff]
    %v533 = vld [vmem:[%s3 + $0x168] sm:$0xff]
    %v534 = vld [vmem:[%s3 + $0x170] sm:$0xff]
    %v535 = vld [vmem:[%s3 + $0x178] sm:$0xff]
    %v536 = vld [vmem:[%s3 + $0x180] sm:$0xff]
    %v537 = vld [vmem:[%s3 + $0x188] sm:$0xff]
    %v538 = vld [vmem:[%s3 + $0x190] sm:$0xff]
    %v539 = vld [vmem:[%s3 + $0x198] sm:$0xff]
    %v540 = vld [vmem:[%s3 + $0x1a0] sm:$0xff]
    %v541 = vld [vmem:[%s3 + $0x1a8] sm:$0xff]
    %v542 = vld [vmem:[%s3 + $0x1b0] sm:$0xff]
    %v543 = vld [vmem:[%s3 + $0x1b8] sm:$0xff]
    %v544 = vld [vmem:[%s3 + $0x1c0] sm:$0xff]
    %v545 = vld [vmem:[%s3 + $0x1c8] sm:$0xff]
    %v546 = vld [vmem:[%s3 + $0x1d0] sm:$0xff]
    %v547 = vld [vmem:[%s3 + $0x1d8] sm:$0xff]
    %v548 = vld [vmem:[%s3 + $0x1e0] sm:$0xff]
    %v549 = vld [vmem:[%s3 + $0x1e8] sm:$0xff]
    %v550 = vld [vmem:[%s3 + $0x1f0] sm:$0xff]
    %v551 = vld [vmem:[%s3 + $0x1f8] sm:$0xff]
    %v552 = vld [vmem:[%s3 + $0x200] sm:$0xff]
    %v553 = vld [vmem:[%s3 + $0x208] sm:$0xff]
    %v554 = vld [vmem:[%s3 + $0x210] sm:$0xff]
    %v555 = vld [vmem:[%s3 + $0x218] sm:$0xff]
    %v556 = vld [vmem:[%s3 + $0x220] sm:$0xff]
    %v557 = vld [vmem:[%s3 + $0x228] sm:$0xff]
    %v558 = vld [vmem:[%s3 + $0x230] sm:$0xff]
    %v559 = vld [vmem:[%s3 + $0x238] sm:$0xff]
    %v560 = vld [vmem:[%s3 + $0x240] sm:$0xff]
    %v561 = vld [vmem:[%s3 + $0x248] sm:$0xff]
    %v562 = vld [vmem:[%s3 + $0x250] sm:$0xff]
    %v563 = vld [vmem:[%s3 + $0x258] sm:$0xff]
    %v564 = vld [vmem:[%s3 + $0x260] sm:$0xff]
    %v565 = vld [vmem:[%s3 + $0x268] sm:$0xff]
    %v566 = vld [vmem:[%s3 + $0x270] sm:$0xff]
    %v567 = vld [vmem:[%s3 + $0x278] sm:$0xff]
    %v568 = vld [vmem:[%s3 + $0x280] sm:$0xff]
    %v569 = vld [vmem:[%s3 + $0x288] sm:$0xff]
    %v570 = vld [vmem:[%s3 + $0x290] sm:$0xff]
    %v571 = vld [vmem:[%s3 + $0x298] sm:$0xff]
    %v572 = vld [vmem:[%s3 + $0x2a0] sm:$0xff]
    %v573 = vld [vmem:[%s3 + $0x2a8] sm:$0xff]
    %v574 = vld [vmem:[%s3 + $0x2b0] sm:$0xff]
    %v575 = vld [vmem:[%s3 + $0x2b8] sm:$0xff]
    %v576 = vld [vmem:[%s3 + $0x2c0] sm:$0xff]
    %v577 = vld [vmem:[%s3 + $0x2c8] sm:$0xff]
    %v578 = vld [vmem:[%s3 + $0x2d0] sm:$0xff]
    %v579 = vld [vmem:[%s3 + $0x2d8] sm:$0xff]
    %v580 = vld [vmem:[%s3 + $0x2e0] sm:$0xff]
    %v581 = vld [vmem:[%s3 + $0x2e8] sm:$0xff]
    %v582 = vld [vmem:[%s3 + $0x2f0] sm:$0xff]
    %v583 = vld [vmem:[%s3 + $0x2f8] sm:$0xff]
    %v584 = vld [vmem:[%s3 + $0x300] sm:$0xff]
    %v585 = vld [vmem:[%s3 + $0x308] sm:$0xff]
    %v586 = vld [vmem:[%s3 + $0x310] sm:$0xff]
    %v587 = vld [vmem:[%s3 + $0x318] sm:$0xff]
    %v588 = vld [vmem:[%s3 + $0x320] sm:$0xff]
    %v589 = vld [vmem:[%s3 + $0x328] sm:$0xff]
    %v590 = vld [vmem:[%s3 + $0x330] sm:$0xff]
    %v591 = vld [vmem:[%s3 + $0x338] sm:$0xff]
    %v592 = vld [vmem:[%s3 + $0x340] sm:$0xff]
    %v593 = vld [vmem:[%s3 + $0x348] sm:$0xff]
    %v594 = vld [vmem:[%s3 + $0x350] sm:$0xff]
    %v595 = vld [vmem:[%s3 + $0x358] sm:$0xff]
    %v596 = vld [vmem:[%s3 + $0x360] sm:$0xff]
    %v597 = vld [vmem:[%s3 + $0x368] sm:$0xff]
    %v598 = vld [vmem:[%s3 + $0x370] sm:$0xff]
    %v599 = vld [vmem:[%s3 + $0x378] sm:$0xff]
    %v600 = vld [vmem:[%s3 + $0x380] sm:$0xff]
    %v601 = vld [vmem:[%s3 + $0x388] sm:$0xff]
    %v602 = vld [vmem:[%s3 + $0x390] sm:$0xff]
    %v603 = vld [vmem:[%s3 + $0x398] sm:$0xff]
    %v604 = vld [vmem:[%s3 + $0x3a0] sm:$0xff]
    %v605 = vld [vmem:[%s3 + $0x3a8] sm:$0xff]
    %v606 = vld [vmem:[%s3 + $0x3b0] sm:$0xff]
    %v607 = vld [vmem:[%s3 + $0x3b8] sm:$0xff]
    %v608 = vld [vmem:[%s3 + $0x3c0] sm:$0xff]
    %v609 = vld [vmem:[%s3 + $0x3c8] sm:$0xff]
    %v610 = vld [vmem:[%s3 + $0x3d0] sm:$0xff]
    %v611 = vld [vmem:[%s3 + $0x3d8] sm:$0xff]
    %v612 = vld [vmem:[%s3 + $0x3e0] sm:$0xff]
    %v613 = vld [vmem:[%s3 + $0x3e8] sm:$0xff]
    %v614 = vld [vmem:[%s3 + $0x3f0] sm:$0xff]
    %v615 = vld [vmem:[%s3 + $0x3f8] sm:$0xff]
    %v616 = vld [vmem:[%s3 + $0x400] sm:$0xff]
    %v617 = vld [vmem:[%s3 + $0x408] sm:$0xff]
    %v618 = vld [vmem:[%s3 + $0x410] sm:$0xff]
    %v619 = vld [vmem:[%s3 + $0x418] sm:$0xff]
    %v620 = vld [vmem:[%s3 + $0x420] sm:$0xff]
    %v621 = vld [vmem:[%s3 + $0x428] sm:$0xff]
    %v622 = vld [vmem:[%s3 + $0x430] sm:$0xff]
    %v623 = vld [vmem:[%s3 + $0x438] sm:$0xff]
    %v624 = vld [vmem:[%s3 + $0x440] sm:$0xff]
    %v625 = vld [vmem:[%s3 + $0x448] sm:$0xff]
    %v626 = vld [vmem:[%s3 + $0x450] sm:$0xff]
    %v627 = vld [vmem:[%s3 + $0x458] sm:$0xff]
    %v628 = vld [vmem:[%s3 + $0x460] sm:$0xff]
    %v629 = vld [vmem:[%s3 + $0x468] sm:$0xff]
    %v630 = vld [vmem:[%s3 + $0x470] sm:$0xff]
    %v631 = vld [vmem:[%s3 + $0x478] sm:$0xff]
    %v632 = vld [vmem:[%s3 + $0x480] sm:$0xff]
    %v633 = vld [vmem:[%s3 + $0x488] sm:$0xff]
    %v634 = vld [vmem:[%s3 + $0x490] sm:$0xff]
    %v635 = vld [vmem:[%s3 + $0x498] sm:$0xff]
    %v636 = vld [vmem:[%s3 + $0x4a0] sm:$0xff]
    %v637 = vld [vmem:[%s3 + $0x4a8] sm:$0xff]
    %v638 = vld [vmem:[%s3 + $0x4b0] sm:$0xff]
    %v639 = vld [vmem:[%s3 + $0x4b8] sm:$0xff]
    %v640 = vld [vmem:[%s3 + $0x4c0] sm:$0xff]
    %v641 = vld [vmem:[%s3 + $0x4c8] sm:$0xff]
    %v642 = vld [vmem:[%s3 + $0x4d0] sm:$0xff]
    %v643 = vld [vmem:[%s3 + $0x4d8] sm:$0xff]
    %v644 = vld [vmem:[%s3 + $0x4e0] sm:$0xff]
    %v645 = vld [vmem:[%s3 + $0x4e8] sm:$0xff]
    %v646 = vld [vmem:[%s3 + $0x4f0] sm:$0xff]
    %v647 = vld [vmem:[%s3 + $0x4f8] sm:$0xff]
    %v648 = vld [vmem:[%s3 + $0x500] sm:$0xff]
    %v649 = vld [vmem:[%s3 + $0x508] sm:$0xff]
    %v650 = vld [vmem:[%s3 + $0x510] sm:$0xff]
    %v651 = vld [vmem:[%s3 + $0x518] sm:$0xff]
    %v652 = vld [vmem:[%s3 + $0x520] sm:$0xff]
    %v653 = vld [vmem:[%s3 + $0x528] sm:$0xff]
    %v654 = vld [vmem:[%s3 + $0x530] sm:$0xff]
    %v655 = vld [vmem:[%s3 + $0x538] sm:$0xff]
    %v656 = vld [vmem:[%s3 + $0x540] sm:$0xff]
    %v657 = vld [vmem:[%s3 + $0x548] sm:$0xff]
    %v658 = vld [vmem:[%s3 + $0x550] sm:$0xff]
    %v659 = vld [vmem:[%s3 + $0x558] sm:$0xff]
    %v660 = vld [vmem:[%s3 + $0x560] sm:$0xff]
    %v661 = vld [vmem:[%s3 + $0x568] sm:$0xff]
    %v662 = vld [vmem:[%s3 + $0x570] sm:$0xff]
    %v663 = vld [vmem:[%s3 + $0x578] sm:$0xff]
    %v664 = vld [vmem:[%s3 + $0x580] sm:$0xff]
    %v665 = vld [vmem:[%s3 + $0x588] sm:$0xff]
    %v666 = vld [vmem:[%s3 + $0x590] sm:$0xff]
    %v667 = vld [vmem:[%s3 + $0x598] sm:$0xff]
    %v668 = vld [vmem:[%s3 + $0x5a0] sm:$0xff]
    %v669 = vld [vmem:[%s3 + $0x5a8] sm:$0xff]
    %v670 = vld [vmem:[%s3 + $0x5b0] sm:$0xff]
    %v671 = vld [vmem:[%s3 + $0x5b8] sm:$0xff]
    %v672 = vld [vmem:[%s3 + $0x5c0] sm:$0xff]
    %v673 = vld [vmem:[%s3 + $0x5c8] sm:$0xff]
    %v674 = vld [vmem:[%s3 + $0x5d0] sm:$0xff]
    %v675 = vld [vmem:[%s3 + $0x5d8] sm:$0xff]
    %v676 = vld [vmem:[%s3 + $0x5e0] sm:$0xff]
    %v677 = vld [vmem:[%s3 + $0x5e8] sm:$0xff]
    %v678 = vld [vmem:[%s3 + $0x5f0] sm:$0xff]
    %v679 = vld [vmem:[%s3 + $0x5f8] sm:$0xff]
    %v680 = vld [vmem:[%s4] sm:$0x3]
    %v682 = vlaneseq
    %v683 = vshrl.u32 %v682, 7
    %v684 = vsub.s32 0, %v683
    %v685 = vrot.slane %v680, %v684
    %v686 = vlaneseq
    %v687 = vshrl.u32 %v686, 7
    %v688 = vsub.s32 1, %v687
    %v689 = vrot.slane %v680, %v688
    %692 = vmatprep.subr.mxu0 %v489
    %693 = vmatpush1.msra.mxu0 %v488
    %694 = vmatprep.subr.mxu0 %v491
    %695 = vmatpush1.msra.mxu0 %v490
    %696 = vmatprep.subr.mxu0 %v493
    %697 = vmatpush1.msra.mxu0 %v492
    %698 = vmatprep.subr.mxu0 %v495
    %699 = vmatpush1.msra.mxu0 %v494
    %700 = vmatprep.subr.mxu0 %v497
    %701 = vmatpush1.msra.mxu0 %v496
    %702 = vmatprep.subr.mxu0 %v499
    %703 = vmatpush1.msra.mxu0 %v498
    %704 = vmatprep.subr.mxu0 %v501
    %705 = vmatpush1.msra.mxu0 %v500
    %706 = vmatprep.subr.mxu0 %v503
    %707 = vmatpush1.msra.mxu0 %v502
    %708 = vmatprep.subr.mxu0 %v505
    %709 = vmatpush1.msra.mxu0 %v504
    %710 = vmatprep.subr.mxu0 %v507
    %711 = vmatpush1.msra.mxu0 %v506
    %712 = vmatprep.subr.mxu0 %v509
    %713 = vmatpush1.msra.mxu0 %v508
    %714 = vmatprep.subr.mxu0 %v511
    %715 = vmatpush1.msra.mxu0 %v510
    %716 = vmatprep.subr.mxu0 %v513
    %717 = vmatpush1.msra.mxu0 %v512
    %718 = vmatprep.subr.mxu0 %v515
    %719 = vmatpush1.msra.mxu0 %v514
    %720 = vmatprep.subr.mxu0 %v517
    %721 = vmatpush1.msra.mxu0 %v516
    %722 = vmatprep.subr.mxu0 %v519
    %723 = vmatpush1.msra.mxu0 %v518
    %724 = vmatprep.subr.mxu0 %v521
    %725 = vmatpush1.msra.mxu0 %v520
    %726 = vmatprep.subr.mxu0 %v523
    %727 = vmatpush1.msra.mxu0 %v522
    %728 = vmatprep.subr.mxu0 %v525
    %729 = vmatpush1.msra.mxu0 %v524
    %730 = vmatprep.subr.mxu0 %v527
    %731 = vmatpush1.msra.mxu0 %v526
    %732 = vmatprep.subr.mxu0 %v529
    %733 = vmatpush1.msra.mxu0 %v528
    %734 = vmatprep.subr.mxu0 %v531
    %735 = vmatpush1.msra.mxu0 %v530
    %736 = vmatprep.subr.mxu0 %v533
    %737 = vmatpush1.msra.mxu0 %v532
    %738 = vmatprep.subr.mxu0 %v535
    %739 = vmatpush1.msra.mxu0 %v534
    %740 = vmatprep.subr.mxu0 %v537
    %741 = vmatpush1.msra.mxu0 %v536
    %742 = vmatprep.subr.mxu0 %v539
    %743 = vmatpush1.msra.mxu0 %v538
    %744 = vmatprep.subr.mxu0 %v541
    %745 = vmatpush1.msra.mxu0 %v540
    %746 = vmatprep.subr.mxu0 %v543
    %747 = vmatpush1.msra.mxu0 %v542
    %748 = vmatprep.subr.mxu0 %v545
    %749 = vmatpush1.msra.mxu0 %v544
    %750 = vmatprep.subr.mxu0 %v547
    %751 = vmatpush1.msra.mxu0 %v546
    %752 = vmatprep.subr.mxu0 %v549
    %753 = vmatpush1.msra.mxu0 %v548
    %754 = vmatprep.subr.mxu0 %v551
    %755 = vmatpush1.msra.mxu0 %v550
    %756 = vmatprep.mubr.f32.mxu0 %v483
    %757 = vmatmul.mubr.f32.gmra.mrb[0].mxu0 %v482
    %v758 = vpop.f32.mrb[0].mxu0
    %v759 = vadd.f32 %v685, %v758
    %v760 = vpop.f32.mrb[0].mxu0
    %v761 = vadd.f32 %v689, %v760
    %762 = vdwg.mxu0
    %763 = vmatprep.subr.mxu0 %v553
    %764 = vmatpush1.msra.mxu0 %v552
    %765 = vmatprep.subr.mxu0 %v555
    %766 = vmatpush1.msra.mxu0 %v554
    %767 = vmatprep.subr.mxu0 %v557
    %768 = vmatpush1.msra.mxu0 %v556
    %769 = vmatprep.subr.mxu0 %v559
    %770 = vmatpush1.msra.mxu0 %v558
    %771 = vmatprep.subr.mxu0 %v561
    %772 = vmatpush1.msra.mxu0 %v560
    %773 = vmatprep.subr.mxu0 %v563
    %774 = vmatpush1.msra.mxu0 %v562
    %775 = vmatprep.subr.mxu0 %v565
    %776 = vmatpush1.msra.mxu0 %v564
    %777 = vmatprep.subr.mxu0 %v567
    %778 = vmatpush1.msra.mxu0 %v566
    %779 = vmatprep.subr.mxu0 %v569
    %780 = vmatpush1.msra.mxu0 %v568
    %781 = vmatprep.subr.mxu0 %v571
    %782 = vmatpush1.msra.mxu0 %v570
    %783 = vmatprep.subr.mxu0 %v573
    %784 = vmatpush1.msra.mxu0 %v572
    %785 = vmatprep.subr.mxu0 %v575
    %786 = vmatpush1.msra.mxu0 %v574
    %787 = vmatprep.subr.mxu0 %v577
    %788 = vmatpush1.msra.mxu0 %v576
    %789 = vmatprep.subr.mxu0 %v579
    %790 = vmatpush1.msra.mxu0 %v578
    %791 = vmatprep.subr.mxu0 %v581
    %792 = vmatpush1.msra.mxu0 %v580
    %793 = vmatprep.subr.mxu0 %v583
    %794 = vmatpush1.msra.mxu0 %v582
    %795 = vmatprep.subr.mxu0 %v585
    %796 = vmatpush1.msra.mxu0 %v584
    %797 = vmatprep.subr.mxu0 %v587
    %798 = vmatpush1.msra.mxu0 %v586
    %799 = vmatprep.subr.mxu0 %v589
    %800 = vmatpush1.msra.mxu0 %v588
    %801 = vmatprep.subr.mxu0 %v591
    %802 = vmatpush1.msra.mxu0 %v590
    %803 = vmatprep.subr.mxu0 %v593
    %804 = vmatpush1.msra.mxu0 %v592
    %805 = vmatprep.subr.mxu0 %v595
    %806 = vmatpush1.msra.mxu0 %v594
    %807 = vmatprep.subr.mxu0 %v597
    %808 = vmatpush1.msra.mxu0 %v596
    %809 = vmatprep.subr.mxu0 %v599
    %810 = vmatpush1.msra.mxu0 %v598
    %811 = vmatprep.subr.mxu0 %v601
    %812 = vmatpush1.msra.mxu0 %v600
    %813 = vmatprep.subr.mxu0 %v603
    %814 = vmatpush1.msra.mxu0 %v602
    %815 = vmatprep.subr.mxu0 %v605
    %816 = vmatpush1.msra.mxu0 %v604
    %817 = vmatprep.subr.mxu0 %v607
    %818 = vmatpush1.msra.mxu0 %v606
    %819 = vmatprep.subr.mxu0 %v609
    %820 = vmatpush1.msra.mxu0 %v608
    %821 = vmatprep.subr.mxu0 %v611
    %822 = vmatpush1.msra.mxu0 %v610
    %823 = vmatprep.subr.mxu0 %v613
    %824 = vmatpush1.msra.mxu0 %v612
    %825 = vmatprep.subr.mxu0 %v615
    %826 = vmatpush1.msra.mxu0 %v614
    %827 = vmatprep.mubr.f32.mxu0 %v485
    %828 = vmatmul.mubr.f32.gmra.mrb[0].mxu0 %v484
    %v829 = vpop.f32.mrb[0].mxu0
    %v830 = vadd.f32 %v759, %v829
    %v831 = vpop.f32.mrb[0].mxu0
    %v832 = vadd.f32 %v761, %v831
    %833 = vdwg.mxu0
    %834 = vmatprep.subr.mxu0 %v617
    %835 = vmatpush1.msra.mxu0 %v616
    %836 = vmatprep.subr.mxu0 %v619
    %837 = vmatpush1.msra.mxu0 %v618
    %838 = vmatprep.subr.mxu0 %v621
    %839 = vmatpush1.msra.mxu0 %v620
    %840 = vmatprep.subr.mxu0 %v623
    %841 = vmatpush1.msra.mxu0 %v622
    %842 = vmatprep.subr.mxu0 %v625
    %843 = vmatpush1.msra.mxu0 %v624
    %844 = vmatprep.subr.mxu0 %v627
    %845 = vmatpush1.msra.mxu0 %v626
    %846 = vmatprep.subr.mxu0 %v629
    %847 = vmatpush1.msra.mxu0 %v628
    %848 = vmatprep.subr.mxu0 %v631
    %849 = vmatpush1.msra.mxu0 %v630
    %850 = vmatprep.subr.mxu0 %v633
    %851 = vmatpush1.msra.mxu0 %v632
    %852 = vmatprep.subr.mxu0 %v635
    %853 = vmatpush1.msra.mxu0 %v634
    %854 = vmatprep.subr.mxu0 %v637
    %855 = vmatpush1.msra.mxu0 %v636
    %856 = vmatprep.subr.mxu0 %v639
    %857 = vmatpush1.msra.mxu0 %v638
    %858 = vmatprep.subr.mxu0 %v641
    %859 = vmatpush1.msra.mxu0 %v640
    %860 = vmatprep.subr.mxu0 %v643
    %861 = vmatpush1.msra.mxu0 %v642
    %862 = vmatprep.subr.mxu0 %v645
    %863 = vmatpush1.msra.mxu0 %v644
    %864 = vmatprep.subr.mxu0 %v647
    %865 = vmatpush1.msra.mxu0 %v646
    %866 = vmatprep.subr.mxu0 %v649
    %867 = vmatpush1.msra.mxu0 %v648
    %868 = vmatprep.subr.mxu0 %v651
    %869 = vmatpush1.msra.mxu0 %v650
    %870 = vmatprep.subr.mxu0 %v653
    %871 = vmatpush1.msra.mxu0 %v652
    %872 = vmatprep.subr.mxu0 %v655
    %873 = vmatpush1.msra.mxu0 %v654
    %874 = vmatprep.subr.mxu0 %v657
    %875 = vmatpush1.msra.mxu0 %v656
    %876 = vmatprep.subr.mxu0 %v659
    %877 = vmatpush1.msra.mxu0 %v658
    %878 = vmatprep.subr.mxu0 %v661
    %879 = vmatpush1.msra.mxu0 %v660
    %880 = vmatprep.subr.mxu0 %v663
    %881 = vmatpush1.msra.mxu0 %v662
    %882 = vmatprep.subr.mxu0 %v665
    %883 = vmatpush1.msra.mxu0 %v664
    %884 = vmatprep.subr.mxu0 %v667
    %885 = vmatpush1.msra.mxu0 %v666
    %886 = vmatprep.subr.mxu0 %v669
    %887 = vmatpush1.msra.mxu0 %v668
    %888 = vmatprep.subr.mxu0 %v671
    %889 = vmatpush1.msra.mxu0 %v670
    %890 = vmatprep.subr.mxu0 %v673
    %891 = vmatpush1.msra.mxu0 %v672
    %892 = vmatprep.subr.mxu0 %v675
    %893 = vmatpush1.msra.mxu0 %v674
    %894 = vmatprep.subr.mxu0 %v677
    %895 = vmatpush1.msra.mxu0 %v676
    %896 = vmatprep.subr.mxu0 %v679
    %897 = vmatpush1.msra.mxu0 %v678
    %898 = vmatprep.mubr.f32.mxu0 %v487
    %899 = vmatmul.mubr.f32.gmra.mrb[0].mxu0 %v486
    %v900 = vpop.f32.mrb[0].mxu0
    %v901 = vadd.f32 %v830, %v900
    %v902 = vpop.f32.mrb[0].mxu0
    %v903 = vadd.f32 %v832, %v902
    %904 = vdwg.mxu0
    %v905 = vtanh.pop %v901
    %v906 = vtanh.pop %v903
    %v907 = vld [vmem:[%s5] sm:$0xff]
    %v908 = vld [vmem:[%s5 + $0x8] sm:$0xff]
    %v909 = vld [vmem:[%s5 + $0x10] sm:$0xff]
    %v910 = vld [vmem:[%s5 + $0x18] sm:$0xff]
    %v911 = vld [vmem:[%s5 + $0x20] sm:$0xff]
    %v912 = vld [vmem:[%s5 + $0x28] sm:$0xff]
    %v913 = vld [vmem:[%s5 + $0x30] sm:$0xff]
    %v914 = vld [vmem:[%s5 + $0x38] sm:$0xff]
    %v915 = vld [vmem:[%s5 + $0x40] sm:$0xff]
    %v916 = vld [vmem:[%s5 + $0x48] sm:$0xff]
    %v917 = vld [vmem:[%s5 + $0x50] sm:$0xff]
    %v918 = vld [vmem:[%s5 + $0x58] sm:$0xff]
    %v919 = vld [vmem:[%s5 + $0x60] sm:$0xff]
    %v920 = vld [vmem:[%s5 + $0x68] sm:$0xff]
    %v921 = vld [vmem:[%s5 + $0x70] sm:$0xff]
    %v922 = vld [vmem:[%s5 + $0x78] sm:$0xff]
    %v923 = vld [vmem:[%s5 + $0x80] sm:$0xff]
    %v924 = vld [vmem:[%s5 + $0x88] sm:$0xff]
    %v925 = vld [vmem:[%s5 + $0x90] sm:$0xff]
    %v926 = vld [vmem:[%s5 + $0x98] sm:$0xff]
    %v927 = vld [vmem:[%s5 + $0xa0] sm:$0xff]
    %v928 = vld [vmem:[%s5 + $0xa8] sm:$0xff]
    %v929 = vld [vmem:[%s5 + $0xb0] sm:$0xff]
    %v930 = vld [vmem:[%s5 + $0xb8] sm:$0xff]
    %v931 = vld [vmem:[%s6] sm:$0x1]
    %v933 = vlaneseq
    %v934 = vshrl.u32 %v933, 7
    %v935 = vsub.s32 0, %v934
    %v936 = vrot.slane %v931, %v935
    %vm938 = vcmask 523264
    %v940 = vsel %vm938, %v906, 0
    %942 = vmatprep.subr.mxu0 0.0
    %943 = vmatpush1.msra.mxu0 %v907
    %944 = vmatprep.subr.mxu0 0.0
    %945 = vmatpush1.msra.mxu0 %v908
    %946 = vmatprep.subr.mxu0 0.0
    %947 = vmatpush1.msra.mxu0 %v909
    %948 = vmatprep.subr.mxu0 0.0
    %949 = vmatpush1.msra.mxu0 %v910
    %950 = vmatprep.subr.mxu0 0.0
    %951 = vmatpush1.msra.mxu0 %v911
    %952 = vmatprep.subr.mxu0 0.0
    %953 = vmatpush1.msra.mxu0 %v912
    %954 = vmatprep.subr.mxu0 0.0
    %955 = vmatpush1.msra.mxu0 %v913
    %956 = vmatprep.subr.mxu0 0.0
    %957 = vmatpush1.msra.mxu0 %v914
    %958 = vmatprep.subr.mxu0 0.0
    %959 = vmatpush1.msra.mxu0 %v915
    %960 = vmatprep.subr.mxu0 0.0
    %961 = vmatpush1.msra.mxu0 %v916
    %962 = vmatprep.subr.mxu0 0.0
    %963 = vmatpush1.msra.mxu0 %v917
    %964 = vmatprep.subr.mxu0 0.0
    %965 = vmatpush1.msra.mxu0 %v918
    %966 = vmatprep.subr.mxu0 0.0
    %967 = vmatpush1.msra.mxu0 %v919
    %968 = vmatprep.subr.mxu0 0.0
    %969 = vmatpush1.msra.mxu0 %v920
    %970 = vmatprep.subr.mxu0 0.0
    %971 = vmatpush1.msra.mxu0 %v921
    %972 = vmatprep.subr.mxu0 0.0
    %973 = vmatpush1.msra.mxu0 %v922
    %974 = vmatprep.subr.mxu0 0.0
    %975 = vmatpush1.msra.mxu0 %v923
    %976 = vmatprep.subr.mxu0 0.0
    %977 = vmatpush1.msra.mxu0 %v924
    %978 = vmatprep.subr.mxu0 0.0
    %979 = vmatpush1.msra.mxu0 %v925
    %980 = vmatprep.subr.mxu0 0.0
    %981 = vmatpush1.msra.mxu0 %v926
    %982 = vmatprep.subr.mxu0 0.0
    %983 = vmatpush1.msra.mxu0 %v927
    %984 = vmatprep.subr.mxu0 0.0
    %985 = vmatpush1.msra.mxu0 %v928
    %986 = vmatprep.subr.mxu0 0.0
    %987 = vmatpush1.msra.mxu0 %v929
    %988 = vmatprep.subr.mxu0 0.0
    %989 = vmatpush1.msra.mxu0 %v930
    %990 = vmatprep.subr.mxu0 0.0
    %991 = vmatpush1.msra.mxu0 0.0
    %992 = vmatprep.subr.mxu0 0.0
    %993 = vmatpush1.msra.mxu0 0.0
    %994 = vmatprep.subr.mxu0 0.0
    %995 = vmatpush1.msra.mxu0 0.0
    %996 = vmatprep.subr.mxu0 0.0
    %997 = vmatpush1.msra.mxu0 0.0
    %998 = vmatprep.subr.mxu0 0.0
    %999 = vmatpush1.msra.mxu0 0.0
    %1000 = vmatprep.subr.mxu0 0.0
    %1001 = vmatpush1.msra.mxu0 0.0
    %1002 = vmatprep.subr.mxu0 0.0
    %1003 = vmatpush1.msra.mxu0 0.0
    %1004 = vmatprep.subr.mxu0 0.0
    %1005 = vmatpush1.msra.mxu0 0.0
    %1006 = vmatprep.mubr.f32.mxu0 %v940
    %1007 = vmatmul.mubr.f32.gmra.mrb[0].mxu0 %v905
    %v1008 = vpop.f32.mrb[0].mxu0
    %v1009 = vadd.f32 %v936, %v1008
    %v1010 = vpop.f32.mrb[0].mxu0
    %1011 = vdwg.mxu0
    %v1012 = vtanh.pop %v1009
    %v1013 = vld [vmem:[%s7] sm:$0xff]
    %v1014 = vld [vmem:[%s7 + $0x8] sm:$0xff]
    %v1015 = vld [vmem:[%s7 + $0x10] sm:$0xff]
    %v1016 = vld [vmem:[%s7 + $0x18] sm:$0x3f]
    %v1017 = vld [vmem:[%s8] sm:$0x1]
    %v1019 = vlaneseq
    %v1020 = vshrl.u32 %v1019, 7
    %v1021 = vsub.s32 0, %v1020
    %v1022 = vrot.slane %v1017, %v1021
    %vm1024 = vcmask 244736
    %v1026 = vsel %vm1024, %v1012, 0
    %vm1028 = vcmask 1045504
    %v1030 = vsel %vm1028, %v1016, 0
    %1032 = vmatprep.subr.mxu0 0.0
    %1033 = vmatpush1.msra.mxu0 %v1013
    %1034 = vmatprep.subr.mxu0 0.0
    %1035 = vmatpush1.msra.mxu0 %v1014
    %1036 = vmatprep.subr.mxu0 0.0
    %1037 = vmatpush1.msra.mxu0 %v1015
    %1038 = vmatprep.subr.mxu0 0.0
    %1039 = vmatpush1.msra.mxu0 %v1030
    %1040 = vmatprep.subr.mxu0 0.0
    %1041 = vmatpush1.msra.mxu0 0.0
    %1042 = vmatprep.subr.mxu0 0.0
    %1043 = vmatpush1.msra.mxu0 0.0
    %1044 = vmatprep.subr.mxu0 0.0
    %1045 = vmatpush1.msra.mxu0 0.0
    %1046 = vmatprep.subr.mxu0 0.0
    %1047 = vmatpush1.msra.mxu0 0.0
    %1048 = vmatprep.subr.mxu0 0.0
    %1049 = vmatpush1.msra.mxu0 0.0
    %1050 = vmatprep.subr.mxu0 0.0
    %1051 = vmatpush1.msra.mxu0 0.0
    %1052 = vmatprep.subr.mxu0 0.0
    %1053 = vmatpush1.msra.mxu0 0.0
    %1054 = vmatprep.subr.mxu0 0.0
    %1055 = vmatpush1.msra.mxu0 0.0
    %1056 = vmatprep.subr.mxu0 0.0
    %1057 = vmatpush1.msra.mxu0 0.0
    %1058 = vmatprep.subr.mxu0 0.0
    %1059 = vmatpush1.msra.mxu0 0.0
    %1060 = vmatprep.subr.mxu0 0.0
    %1061 = vmatpush1.msra.mxu0 0.0
    %1062 = vmatprep.subr.mxu0 0.0
    %1063 = vmatpush1.msra.mxu0 0.0
    %1064 = vmatprep.subr.mxu0 0.0
    %1065 = vmatpush1.msra.mxu0 0.0
    %1066 = vmatprep.subr.mxu0 0.0
    %1067 = vmatpush1.msra.mxu0 0.0
    %1068 = vmatprep.subr.mxu0 0.0
    %1069 = vmatpush1.msra.mxu0 0.0
    %1070 = vmatprep.subr.mxu0 0.0
    %1071 = vmatpush1.msra.mxu0 0.0
    %1072 = vmatprep.subr.mxu0 0.0
    %1073 = vmatpush1.msra.mxu0 0.0
    %1074 = vmatprep.subr.mxu0 0.0
    %1075 = vmatpush1.msra.mxu0 0.0
    %1076 = vmatprep.subr.mxu0 0.0
    %1077 = vmatpush1.msra.mxu0 0.0
    %1078 = vmatprep.subr.mxu0 0.0
    %1079 = vmatpush1.msra.mxu0 0.0
    %1080 = vmatprep.subr.mxu0 0.0
    %1081 = vmatpush1.msra.mxu0 0.0
    %1082 = vmatprep.subr.mxu0 0.0
    %1083 = vmatpush1.msra.mxu0 0.0
    %1084 = vmatprep.subr.mxu0 0.0
    %1085 = vmatpush1.msra.mxu0 0.0
    %1086 = vmatprep.subr.mxu0 0.0
    %1087 = vmatpush1.msra.mxu0 0.0
    %1088 = vmatprep.subr.mxu0 0.0
    %1089 = vmatpush1.msra.mxu0 0.0
    %1090 = vmatprep.subr.mxu0 0.0
    %1091 = vmatpush1.msra.mxu0 0.0
    %1092 = vmatprep.subr.mxu0 0.0
    %1093 = vmatpush1.msra.mxu0 0.0
    %1094 = vmatprep.subr.mxu0 0.0
    %1095 = vmatpush1.msra.mxu0 0.0
    %1096 = vmatprep.mubr.f32.mxu0 0.0
    %1097 = vmatmul.mubr.f32.gmra.mrb[0].mxu0 %v1026
    %v1098 = vpop.f32.mrb[0].mxu0
    %v1099 = vadd.f32 %v1022, %v1098
    %v1100 = vpop.f32.mrb[0].mxu0
    %1101 = vdwg.mxu0
    %v1102 = vtanh.pop %v1099
    %vm1103 = vcmask 74752
    %1104 = vst.msk [vmem:[#allocation2] sm:$0x3] %vm1103, %v1102
    // Predicated region
    $region38: #{cnn_forward.1} parent=1 // pred_check
      _
    $region39: #{cnn_forward.1} parent=1 // pred_check_branch
      %1106 = sbr.rel (0) target = $region41
    $region40: #{cnn_forward.1} parent=1 // pred_region
      %s1108 = ssub.s32 32, 32
      %1109 = vsyncadd [#allocation3], %s1108
      %s1111 = sshll.u32 [#allocation2], 4
      %s1112 = int_to_ptr.vmem [resolvable:$true] %s1111
      %1114 = dma.vmem_to_hbm [thread:$0]  %s1112, 32, %s9, [#allocation3]
    $region41: #{cnn_forward.1} parent=1 // pred_fallthru
      _
    // Predicated region
    $region42: #{cnn_forward.1} parent=1 // pred_check
      _
    $region43: #{cnn_forward.1} parent=1 // pred_check_branch
      %1116 = sbr.rel (0) target = $region45
    $region44: #{cnn_forward.1} parent=1 // pred_region
      %1117 = dma.done [#allocation3], 32
    $region45: #{cnn_forward.1} parent=1 // pred_fallthru
      _
    %1118 = vsyncpa [#allocation3], 1

</llo_original>
